<compile_context>
chip_gen: v5e
topology: v5e:2x2
jax: 0.10.0
libtpu: 0.0.40
codegen_flags: <defaults>
</compile_context>

<pallas_src>
import jax
import jax.numpy as jnp
from jax.experimental import pallas as pl
from jax.experimental.pallas import tpu as pltpu

NEG_SLOPE = 0.01  # nn.LeakyReLU() default
LANE = 128


def _round_up(n, m):
    return ((n + m - 1) // m) * m


def _leaky_relu(x):
    return jnp.where(x > 0, x, NEG_SLOPE * x)


def discriminator_kernel(x_ref, w1_ref, w2_ref, w3_ref, b_ref, o_ref):
    # Ref shapes are static -> use them for static bias slicing.
    hp = w1_ref.shape[1]            # padded hidden width (multiple of 128)
    op = w3_ref.shape[1]            # true out_size (unpadded)
    b1 = b_ref[:, :hp]
    b2 = b_ref[:, hp:2 * hp]
    b3 = b_ref[:, 2 * hp:2 * hp + op]

    # bf16 operands -> single-pass MXU matmuls; f32 accumulation.
    x = x_ref[...].astype(jnp.bfloat16)

    # layer1 + LeakyReLU (+ Dropout as identity)
    h = jnp.dot(x, w1_ref[...], preferred_element_type=jnp.float32) + b1
    h = _leaky_relu(h)

    # layer2 + LeakyReLU (+ Dropout as identity)
    h = jnp.dot(h.astype(jnp.bfloat16), w2_ref[...],
                preferred_element_type=jnp.float32) + b2
    h = _leaky_relu(h)

    # layer3 + sigmoid (output stays at true out_size -> tiny writeback)
    h = jnp.dot(h.astype(jnp.bfloat16), w3_ref[...],
                preferred_element_type=jnp.float32) + b3
    o_ref[...] = jax.nn.sigmoid(h)


def prepare_params(params):
    """One-time param prep:
      * transpose to [in, out] layout,
      * zero-pad ONLY the hidden width to lane width (128),
      * cast weights to bf16 (single-pass MXU), biases stay f32,
      * pack the three biases into one (1, 2*hid_pad + out_size) buffer.

    Padding is exact: padded hidden columns get zero weights and zero bias,
    stay identically zero through Linear+LeakyReLU, and are multiplied by
    zero rows of the next weight, so results are unaffected."""
    w1, b1 = params["w1"], params["b1"]  # [hid, in],  [hid]
    w2, b2 = params["w2"], params["b2"]  # [hid, hid], [hid]
    w3, b3 = params["w3"], params["b3"]  # [out, hid], [out]
    hid, in_size = w1.shape
    out_size = w3.shape[0]
    hp = _round_up(hid, LANE)

    cd = jnp.bfloat16
    w1p = jnp.zeros((in_size, hp), cd).at[:, :hid].set(w1.T.astype(cd))
    w2p = jnp.zeros((hp, hp), cd).at[:hid, :hid].set(w2.T.astype(cd))
    w3p = jnp.zeros((hp, out_size), cd).at[:hid, :].set(w3.T.astype(cd))

    bias = jnp.zeros((1, 2 * hp + out_size), jnp.float32)
    bias = bias.at[0, :hid].set(b1)
    bias = bias.at[0, hp:hp + hid].set(b2)
    bias = bias.at[0, 2 * hp:].set(b3)

    return {"w1": w1p, "w2": w2p, "w3": w3p, "bias": bias,
            "in_size": in_size, "hid": hid, "out_size": out_size, "hp": hp}


def discriminator_forward(x, prep, *, tb=2048, min_grid_batch=256):
    """x: [B, in_size]; prep: output of prepare_params."""
    w1, w2, w3, bias = prep["w1"], prep["w2"], prep["w3"], prep["bias"]
    in_size, out_size, hp = prep["in_size"], prep["out_size"], prep["hp"]
    bw = bias.shape[1]

    B = x.shape[0]
    x = x.astype(jnp.float32)  # x = x.float()

    if B < min_grid_batch:
        # Truly tiny batch: gridless single shot, no pipeline machinery.
        return pl.pallas_call(
            discriminator_kernel,
            out_shape=jax.ShapeDtypeStruct((B, out_size), jnp.float32),
        )(x, w1, w2, w3, bias)

    # >= 2 grid steps so both v7x TensorCores get work; tile sized to the
    # batch so the last tile is never mostly padding.
    grid_steps = max(2, pl.cdiv(B, tb))
    tile_b = _round_up(pl.cdiv(B, grid_steps), 8)
    bp = tile_b * grid_steps

    # Pad only the ragged batch tail (rows are independent; padded rows'
    # outputs are sliced off below). No feature-dim padding at all.
    xp = x if bp == B else jnp.pad(x, ((0, bp - B), (0, 0)))

    # Rough VMEM budget: double-buffered x/out tiles + resident weights/bias.
    tile_bytes = tile_b * (in_size + out_size) * 4
    fixed_bytes = (w1.size + w2.size + w3.size) * 2 + bias.size * 4
    vmem_limit = int(min(max(2 * (2 * tile_bytes + fixed_bytes),
                             16 * 1024 * 1024),
                         48 * 1024 * 1024))

    out = pl.pallas_call(
        discriminator_kernel,
        out_shape=jax.ShapeDtypeStruct((bp, out_size), jnp.float32),
        grid=(grid_steps,),
        in_specs=[
            pl.BlockSpec((tile_b, in_size), lambda i: (i, 0)),
            pl.BlockSpec((in_size, hp), lambda i: (0, 0)),
            pl.BlockSpec((hp, hp), lambda i: (0, 0)),
            pl.BlockSpec((hp, out_size), lambda i: (0, 0)),
            pl.BlockSpec((1, bw), lambda i: (0, 0)),
        ],
        out_specs=pl.BlockSpec((tile_b, out_size), lambda i: (i, 0)),
        compiler_params=pltpu.CompilerParams(
            dimension_semantics=("parallel",),
            vmem_limit_bytes=vmem_limit),
    )(xp, w1, w2, w3, bias)

    return out[:B]


def init_params(key, in_size, hid_size, out_size):
    """Deterministic PyTorch-style (Kaiming-uniform-ish) init; PyTorch layout."""
    ks = jax.random.split(key, 6)

    def lin(kw, kb, fan_in, fan_out):
        bound = 1.0 / jnp.sqrt(fan_in)
        w = jax.random.uniform(kw, (fan_out, fan_in), jnp.float32, -bound, bound)
        b = jax.random.uniform(kb, (fan_out,), jnp.float32, -bound, bound)
        return w, b

    w1, b1 = lin(ks[0], ks[1], in_size, hid_size)
    w2, b2 = lin(ks[2], ks[3], hid_size, hid_size)
    w3, b3 = lin(ks[4], ks[5], hid_size, out_size)
    return {"w1": w1, "b1": b1, "w2": w2, "b2": b2, "w3": w3, "b3": b3}


def reference_forward(x, params):
    h = x.astype(jnp.float32) @ params["w1"].T + params["b1"]
    h = jnp.where(h > 0, h, NEG_SLOPE * h)
    h = h @ params["w2"].T + params["b2"]
    h = jnp.where(h > 0, h, NEG_SLOPE * h)
    h = h @ params["w3"].T + params["b3"]
    return jax.nn.sigmoid(h)


if __name__ == "__main__":
    key = jax.random.PRNGKey(0)
    k_x, k_p, k_x2 = jax.random.split(key, 3)

    B, in_size, hid_size, out_size = 8, 32, 32, 1
    params = init_params(k_p, in_size, hid_size, out_size)
    prep = prepare_params(params)  # one-time: transpose + pad hidden + bf16

    # bf16 MXU operands -> loosened tolerance vs. the f32 reference.
    ATOL, RTOL = 1e-2, 1e-2

    # Small batch: gridless single-shot path.
    x = jax.random.normal(k_x, (B, in_size), jnp.float32)
    out = jax.block_until_ready(discriminator_forward(x, prep))
    ref = reference_forward(x, params)
    assert out.shape == (B, out_size)
    assert jnp.allclose(out, ref, atol=ATOL, rtol=RTOL), "small-batch mismatch"

    # Larger (non-multiple) batch: batch-tiled, 2-step parallel grid path
    # with a ragged tail (300 -> 2 tiles of 152).
    B2 = 300
    x2 = jax.random.normal(k_x2, (B2, in_size), jnp.float32)
    out2 = jax.block_until_ready(discriminator_forward(x2, prep))
    ref2 = reference_forward(x2, params)
    assert out2.shape == (B2, out_size)
    assert jnp.allclose(out2, ref2, atol=ATOL, rtol=RTOL), "tiled-batch mismatch"

    print("KERNEL_OK")
</pallas_src>

<mosaic_0001>
module attributes {stable_mosaic.version = 11 : i64} {
  func.func @discriminator_kernel(%arg0: memref<8x32xf32, #tpu.memory_space<vmem>>, %arg1: memref<32x128xbf16, #tpu.memory_space<vmem>>, %arg2: memref<128x128xbf16, #tpu.memory_space<vmem>>, %arg3: memref<128x1xbf16, #tpu.memory_space<vmem>>, %arg4: memref<1x257xf32, #tpu.memory_space<vmem>>, %arg5: memref<8x1xf32, #tpu.memory_space<vmem>>) attributes {dimension_semantics = [], scalar_prefetch = 0 : i64, scratch_operands = 0 : i64, tpu.core_type = #tpu.core_type<tc>} {
    %c0 = arith.constant 0 : index
    %c0_0 = arith.constant 0 : index
    %0 = vector.load %arg4[%c0, %c0_0] : memref<1x257xf32, #tpu.memory_space<vmem>>, vector<1x128xf32>
    %c0_1 = arith.constant 0 : index
    %c128 = arith.constant 128 : index
    %1 = vector.load %arg4[%c0_1, %c128] : memref<1x257xf32, #tpu.memory_space<vmem>>, vector<1x128xf32>
    %c0_2 = arith.constant 0 : index
    %c256 = arith.constant 256 : index
    %2 = vector.load %arg4[%c0_2, %c256] : memref<1x257xf32, #tpu.memory_space<vmem>>, vector<1x1xf32>
    %c0_3 = arith.constant 0 : index
    %c0_4 = arith.constant 0 : index
    %3 = vector.load %arg0[%c0_3, %c0_4] : memref<8x32xf32, #tpu.memory_space<vmem>>, vector<8x32xf32>
    %4 = arith.truncf %3 : vector<8x32xf32> to vector<8x32xbf16>
    %c0_5 = arith.constant 0 : index
    %c0_6 = arith.constant 0 : index
    %5 = vector.load %arg1[%c0_5, %c0_6] : memref<32x128xbf16, #tpu.memory_space<vmem>>, vector<32x128xbf16>
    %cst = arith.constant dense<0.000000e+00> : vector<8x128xf32>
    %6 = tpu.matmul %4, %5, %cst {dimension_numbers = #tpu.dot_dimension_numbers<[1], [0], [0], [1], [0, 0, 1, 1], [], []>} : vector<8x32xbf16>, vector<32x128xbf16>, vector<8x128xf32> -> vector<8x128xf32>
    %7 = vector.broadcast %0 : vector<1x128xf32> to vector<8x128xf32>
    %8 = arith.addf %6, %7 : vector<8x128xf32>
    %cst_7 = arith.constant 0.000000e+00 : f32
    %9 = vector.broadcast %cst_7 : f32 to vector<8x128xf32>
    %10 = arith.cmpf ogt, %8, %9 : vector<8x128xf32>
    %cst_8 = arith.constant 0.00999999977 : f32
    %11 = vector.broadcast %cst_8 : f32 to vector<8x128xf32>
    %12 = arith.mulf %11, %8 : vector<8x128xf32>
    %13 = arith.select %10, %8, %12 : vector<8x128xi1>, vector<8x128xf32>
    %14 = arith.truncf %13 : vector<8x128xf32> to vector<8x128xbf16>
    %c0_9 = arith.constant 0 : index
    %c0_10 = arith.constant 0 : index
    %15 = vector.load %arg2[%c0_9, %c0_10] : memref<128x128xbf16, #tpu.memory_space<vmem>>, vector<128x128xbf16>
    %cst_11 = arith.constant dense<0.000000e+00> : vector<8x128xf32>
    %16 = tpu.matmul %14, %15, %cst_11 {dimension_numbers = #tpu.dot_dimension_numbers<[1], [0], [0], [1], [0, 0, 1, 1], [], []>} : vector<8x128xbf16>, vector<128x128xbf16>, vector<8x128xf32> -> vector<8x128xf32>
    %17 = vector.broadcast %1 : vector<1x128xf32> to vector<8x128xf32>
    %18 = arith.addf %16, %17 : vector<8x128xf32>
    %cst_12 = arith.constant 0.000000e+00 : f32
    %19 = vector.broadcast %cst_12 : f32 to vector<8x128xf32>
    %20 = arith.cmpf ogt, %18, %19 : vector<8x128xf32>
    %cst_13 = arith.constant 0.00999999977 : f32
    %21 = vector.broadcast %cst_13 : f32 to vector<8x128xf32>
    %22 = arith.mulf %21, %18 : vector<8x128xf32>
    %23 = arith.select %20, %18, %22 : vector<8x128xi1>, vector<8x128xf32>
    %24 = arith.truncf %23 : vector<8x128xf32> to vector<8x128xbf16>
    %c0_14 = arith.constant 0 : index
    %c0_15 = arith.constant 0 : index
    %25 = vector.load %arg3[%c0_14, %c0_15] : memref<128x1xbf16, #tpu.memory_space<vmem>>, vector<128x1xbf16>
    %cst_16 = arith.constant dense<0.000000e+00> : vector<8x1xf32>
    %26 = tpu.matmul %24, %25, %cst_16 {dimension_numbers = #tpu.dot_dimension_numbers<[1], [0], [0], [1], [0, 0, 1, 1], [], []>} : vector<8x128xbf16>, vector<128x1xbf16>, vector<8x1xf32> -> vector<8x1xf32>
    %27 = vector.broadcast %2 : vector<1x1xf32> to vector<8x1xf32>
    %28 = arith.addf %26, %27 : vector<8x1xf32>
    %29 = arith.negf %28 : vector<8x1xf32>
    %30 = math.exp %29 : vector<8x1xf32>
    %cst_17 = arith.constant 1.000000e+00 : f32
    %31 = vector.broadcast %cst_17 : f32 to vector<8x1xf32>
    %32 = arith.addf %31, %30 : vector<8x1xf32>
    %33 = arith.divf %31, %32 : vector<8x1xf32>
    %c0_18 = arith.constant 0 : index
    %c0_19 = arith.constant 0 : index
    %34 = vector.load %arg5[%c0_18, %c0_19] : memref<8x1xf32, #tpu.memory_space<vmem>>, vector<8x1xf32>
    tpu.vector_store %arg5[%c0_18, %c0_19], %33 {strides = array<i32>} : memref<8x1xf32, #tpu.memory_space<vmem>>, vector<8x1xf32>,
    return
  }
}

</mosaic_0001>

<llo_original>
// kernel: tpu_custom_call.1
$region0: #{tpu_custom_call.1}
  #allocation0 [shape = 'u32[]', space=smem, size = 0x4, offset = 0x4, fixed_abs, tag = 'smem constant byte address 0x4 - core index']
  #allocation1 [shape = 'u32[72,128]{1,0:T(1,128)}', space=vmem, size = 0x9000, scoped, tag = 'internal scratch']
  %s0 = inlined_call_operand.hbm [shape: f32[8,32], index: 0, kind: input, shape index: {}]
  %s1 = inlined_call_operand.hbm [shape: bf16[32,128], index: 1, kind: input, shape index: {}]
  %s2 = inlined_call_operand.vmem [shape: bf16[128,128], index: 2, kind: input, shape index: {}]
  %s3 = inlined_call_operand.vmem [shape: bf16[128,1], index: 3, kind: input, shape index: {}]
  %s4 = inlined_call_operand.hbm [shape: f32[1,257], index: 4, kind: input, shape index: {}]
  %s5 = inlined_call_operand.vmem [shape: f32[8,1], index: 5, kind: output, shape index: {}]
  %s6 = sld [smem:[#allocation0]]
  $region42: #{tpu_custom_call.1} parent=0
    _
  %s8 = ssub.s32 1, %s6
  %s9 = scalar_select 0, %s8, %s6
  $region1: #{tpu_custom_call.1} parent=0
    #allocation2 [shape = 'u8[4096]{0}', space=vmem, size = 0x1000, scoped, tag = 'input window, operand 0, single buffered']
    #allocation3 [shape = 's32[1]{0}', space=sflag, size = 0x4, scoped, tag = 'scoped memory for tpu_custom_call.1']
    #allocation4 [shape = 'u8[8192]{0}', space=vmem, size = 0x2000, scoped, tag = 'input window, operand 1, single buffered']
    #allocation5 [shape = 's32[1]{0}', space=sflag, size = 0x4, scoped, tag = 'scoped memory for tpu_custom_call.1']
    #allocation6 [shape = 'u8[1536]{0}', space=vmem, size = 0x800, scoped, tag = 'input window, operand 4, single buffered']
    %10 = vsyncpa [#allocation3], 0
    %11 = vsyncpa [#allocation5], 0
    // Predicated region
    $region2: #{tpu_custom_call.1} parent=1 // pred_check
      _
    $region3: #{tpu_custom_call.1} parent=1 // pred_check_branch
      %13 = sbr.rel (0) target = $region5
    $region4: #{tpu_custom_call.1} parent=1 // pred_region
      %15 = vsyncadd [#allocation3], 0
      %s17 = sshll.u32 %s0, 4
      %s18 = int_to_ptr.hbm [resolvable:$true] %s17
      %s19 = sshll.u32 [#allocation2], 4
      %s20 = int_to_ptr.vmem [resolvable:$true] %s19
      %22 = dma.hbm_to_vmem [thread:$0]  %s18, 128, %s20, [#allocation3]
    $region5: #{tpu_custom_call.1} parent=1 // pred_fallthru
      _
    // Predicated region
    $region6: #{tpu_custom_call.1} parent=1 // pred_check
      _
    $region7: #{tpu_custom_call.1} parent=1 // pred_check_branch
      %24 = sbr.rel (0) target = $region9
    $region8: #{tpu_custom_call.1} parent=1 // pred_region
      %26 = vsyncadd [#allocation5], 0
      %s27 = sshll.u32 %s1, 4
      %s28 = int_to_ptr.hbm [resolvable:$true] %s27
      %s29 = sshll.u32 [#allocation4], 4
      %s30 = int_to_ptr.vmem [resolvable:$true] %s29
      %35 = dma.hbm_to_vmem [thread:$0]  %s28, 256, %s30, [#allocation5], 64, 64, 4
    $region9: #{tpu_custom_call.1} parent=1 // pred_fallthru
      _
    // Predicated region
    $region10: #{tpu_custom_call.1} parent=1 // pred_check
      _
    $region11: #{tpu_custom_call.1} parent=1 // pred_check_branch
      %37 = sbr.rel (0) target = $region13
    $region12: #{tpu_custom_call.1} parent=1 // pred_region
      _
    $region13: #{tpu_custom_call.1} parent=1 // pred_fallthru
      _
    // Predicated region
    $region14: #{tpu_custom_call.1} parent=1 // pred_check
      _
    $region15: #{tpu_custom_call.1} parent=1 // pred_check_branch
      %39 = sbr.rel (0) target = $region17
    $region16: #{tpu_custom_call.1} parent=1 // pred_region
      _
    $region17: #{tpu_custom_call.1} parent=1 // pred_fallthru
      _
    // Predicated region
    $region18: #{tpu_custom_call.1} parent=1 // pred_check
      _
    $region19: #{tpu_custom_call.1} parent=1 // pred_check_branch
      %41 = sbr.rel (0) target = $region21
    $region20: #{tpu_custom_call.1} parent=1 // pred_region
      %43 = vsyncadd [#allocation5], 0
      %s45 = sshll.u32 %s4, 4
      %s46 = int_to_ptr.hbm [resolvable:$true] %s45
      %s47 = sshll.u32 [#allocation6], 4
      %s48 = int_to_ptr.vmem [resolvable:$true] %s47
      %50 = dma.hbm_to_vmem [thread:$0]  %s46, 48, %s48, [#allocation5]
    $region21: #{tpu_custom_call.1} parent=1 // pred_fallthru
      _
    // Predicated region
    $region22: #{tpu_custom_call.1} parent=1 // pred_check
      _
    $region23: #{tpu_custom_call.1} parent=1 // pred_check_branch
      %52 = sbr.rel (0) target = $region25
    $region24: #{tpu_custom_call.1} parent=1 // pred_region
      %54 = dma.done [#allocation3], 128
    $region25: #{tpu_custom_call.1} parent=1 // pred_fallthru
      _
    // Predicated region
    $region26: #{tpu_custom_call.1} parent=1 // pred_check
      _
    $region27: #{tpu_custom_call.1} parent=1 // pred_check_branch
      %56 = sbr.rel (0) target = $region29
    $region28: #{tpu_custom_call.1} parent=1 // pred_region
      %58 = dma.done [#allocation5], 256
    $region29: #{tpu_custom_call.1} parent=1 // pred_fallthru
      _
    // Predicated region
    $region30: #{tpu_custom_call.1} parent=1 // pred_check
      _
    $region31: #{tpu_custom_call.1} parent=1 // pred_check_branch
      %60 = sbr.rel (0) target = $region33
    $region32: #{tpu_custom_call.1} parent=1 // pred_region
      %62 = dma.done [#allocation5], 48
    $region33: #{tpu_custom_call.1} parent=1 // pred_fallthru
      _
    %v64 = vld [vmem:[#allocation6] sm:$0x1]
    %v65 = vld [vmem:[#allocation6 + $0x1] sm:$0x1]
    %v66 = vld [vmem:[#allocation6 + $0x2] sm:$0x1]
    %v67 = vld [vmem:[#allocation2] sm:$0xff]
    %v68 = vpack.c.bf16 %v67, %v67
    %v69 = vld [vmem:[#allocation4] sm:$0xf]
    %v70 = vld [vmem:[#allocation4 + $0x4] sm:$0xf]
    %v71 = vld [vmem:[#allocation4 + $0x8] sm:$0xf]
    %v72 = vld [vmem:[#allocation4 + $0xc] sm:$0xf]
    %v74 = vperm.slane %v64, 0
    %v80 = vunpack.c.l.b16 %v69
    %v81 = vunpack.c.l.b16 %v70
    %v82 = vunpack.c.l.b16 %v71
    %v83 = vunpack.c.l.b16 %v72
    %v84 = vpack.c.b16 %v81, %v80
    %v85 = vpack.c.b16 %v83, %v82
    %vm88 = vcmask 261120
    %v90 = vsel %vm88, %v68, 0
    %92 = vmatpush.bf16.msra.mxu0 0
    %93 = vmatpush.bf16.msra.mxu0 0
    %94 = vmatpush.bf16.msra.mxu0 0
    %95 = vmatpush.bf16.msra.mxu0 0
    %96 = vmatpush.bf16.msra.mxu0 0
    %97 = vmatpush.bf16.msra.mxu0 0
    %98 = vmatpush.bf16.msra.mxu0 %v85
    %99 = vmatpush.bf16.msra.mxu0 %v84
    %100 = vmatmul.bf16.gmra.mxu0 %v90
    %v101 = vpop.f32.mrf.mxu0
    %v102 = vadd.f32 %v74, %v101
    %v103 = vpop.f32.mrf.mxu0
    %104 = vdwg.mxu0
    %vm105 = vcmp.gt.f32.partialorder %v102, 0.0
    %v106 = vmul.f32 %v102, 0.01
    %v107 = vsel %vm105, %v102, %v106
    %v108 = vpack.c.bf16 %v107, %v107
    %v109 = vld [vmem:[%s2] sm:$0xf]
    %v110 = vld [vmem:[%s2 + $0x4] sm:$0xf]
    %v111 = vld [vmem:[%s2 + $0x8] sm:$0xf]
    %v112 = vld [vmem:[%s2 + $0xc] sm:$0xf]
    %v113 = vld [vmem:[%s2 + $0x10] sm:$0xf]
    %v114 = vld [vmem:[%s2 + $0x14] sm:$0xf]
    %v115 = vld [vmem:[%s2 + $0x18] sm:$0xf]
    %v116 = vld [vmem:[%s2 + $0x1c] sm:$0xf]
    %v117 = vld [vmem:[%s2 + $0x20] sm:$0xf]
    %v118 = vld [vmem:[%s2 + $0x24] sm:$0xf]
    %v119 = vld [vmem:[%s2 + $0x28] sm:$0xf]
    %v120 = vld [vmem:[%s2 + $0x2c] sm:$0xf]
    %v121 = vld [vmem:[%s2 + $0x30] sm:$0xf]
    %v122 = vld [vmem:[%s2 + $0x34] sm:$0xf]
    %v123 = vld [vmem:[%s2 + $0x38] sm:$0xf]
    %v124 = vld [vmem:[%s2 + $0x3c] sm:$0xf]
    %v126 = vperm.slane %v65, 0
    %v144 = vunpack.c.l.b16 %v109
    %v145 = vunpack.c.l.b16 %v110
    %v146 = vunpack.c.l.b16 %v111
    %v147 = vunpack.c.l.b16 %v112
    %v148 = vunpack.c.l.b16 %v113
    %v149 = vunpack.c.l.b16 %v114
    %v150 = vunpack.c.l.b16 %v115
    %v151 = vunpack.c.l.b16 %v116
    %v152 = vunpack.c.l.b16 %v117
    %v153 = vunpack.c.l.b16 %v118
    %v154 = vunpack.c.l.b16 %v119
    %v155 = vunpack.c.l.b16 %v120
    %v156 = vunpack.c.l.b16 %v121
    %v157 = vunpack.c.l.b16 %v122
    %v158 = vunpack.c.l.b16 %v123
    %v159 = vunpack.c.l.b16 %v124
    %v160 = vpack.c.b16 %v145, %v144
    %v161 = vpack.c.b16 %v147, %v146
    %v162 = vpack.c.b16 %v149, %v148
    %v163 = vpack.c.b16 %v151, %v150
    %v164 = vpack.c.b16 %v153, %v152
    %v165 = vpack.c.b16 %v155, %v154
    %v166 = vpack.c.b16 %v157, %v156
    %v167 = vpack.c.b16 %v159, %v158
    %176 = vmatpush.bf16.msra.mxu0 %v167
    %177 = vmatpush.bf16.msra.mxu0 %v166
    %178 = vmatpush.bf16.msra.mxu0 %v165
    %179 = vmatpush.bf16.msra.mxu0 %v164
    %180 = vmatpush.bf16.msra.mxu0 %v163
    %181 = vmatpush.bf16.msra.mxu0 %v162
    %182 = vmatpush.bf16.msra.mxu0 %v161
    %183 = vmatpush.bf16.msra.mxu0 %v160
    %184 = vmatmul.bf16.gmra.mxu0 %v108
    %v185 = vpop.f32.mrf.mxu0
    %v186 = vadd.f32 %v126, %v185
    %v187 = vpop.f32.mrf.mxu0
    %188 = vdwg.mxu0
    %vm189 = vcmp.gt.f32.partialorder %v186, 0.0
    %v190 = vmul.f32 %v186, 0.01
    %v191 = vsel %vm189, %v186, %v190
    %v192 = vpack.c.bf16 %v191, %v191
    %v193 = vld [vmem:[%s3] sm:$0xf]
    %v194 = vld [vmem:[%s3 + $0x4] sm:$0xf]
    %v195 = vld [vmem:[%s3 + $0x8] sm:$0xf]
    %v196 = vld [vmem:[%s3 + $0xc] sm:$0xf]
    %v197 = vld [vmem:[%s3 + $0x10] sm:$0xf]
    %v198 = vld [vmem:[%s3 + $0x14] sm:$0xf]
    %v199 = vld [vmem:[%s3 + $0x18] sm:$0xf]
    %v200 = vld [vmem:[%s3 + $0x1c] sm:$0xf]
    %v201 = vld [vmem:[%s3 + $0x20] sm:$0xf]
    %v202 = vld [vmem:[%s3 + $0x24] sm:$0xf]
    %v203 = vld [vmem:[%s3 + $0x28] sm:$0xf]
    %v204 = vld [vmem:[%s3 + $0x2c] sm:$0xf]
    %v205 = vld [vmem:[%s3 + $0x30] sm:$0xf]
    %v206 = vld [vmem:[%s3 + $0x34] sm:$0xf]
    %v207 = vld [vmem:[%s3 + $0x38] sm:$0xf]
    %v208 = vld [vmem:[%s3 + $0x3c] sm:$0xf]
    %v210 = vperm.slane %v66, 0
    %v228 = vunpack.c.l.b16 %v193
    %v229 = vunpack.c.l.b16 %v194
    %v230 = vunpack.c.l.b16 %v195
    %v231 = vunpack.c.l.b16 %v196
    %v232 = vunpack.c.l.b16 %v197
    %v233 = vunpack.c.l.b16 %v198
    %v234 = vunpack.c.l.b16 %v199
    %v235 = vunpack.c.l.b16 %v200
    %v236 = vunpack.c.l.b16 %v201
    %v237 = vunpack.c.l.b16 %v202
    %v238 = vunpack.c.l.b16 %v203
    %v239 = vunpack.c.l.b16 %v204
    %v240 = vunpack.c.l.b16 %v205
    %v241 = vunpack.c.l.b16 %v206
    %v242 = vunpack.c.l.b16 %v207
    %v243 = vunpack.c.l.b16 %v208
    %v244 = vpack.c.b16 %v229, %v228
    %v245 = vpack.c.b16 %v231, %v230
    %v246 = vpack.c.b16 %v233, %v232
    %v247 = vpack.c.b16 %v235, %v234
    %v248 = vpack.c.b16 %v237, %v236
    %v249 = vpack.c.b16 %v239, %v238
    %v250 = vpack.c.b16 %v241, %v240
    %v251 = vpack.c.b16 %v243, %v242
    %260 = vmatpush.bf16.msra.mxu0 %v251
    %261 = vmatpush.bf16.msra.mxu0 %v250
    %262 = vmatpush.bf16.msra.mxu0 %v249
    %263 = vmatpush.bf16.msra.mxu0 %v248
    %264 = vmatpush.bf16.msra.mxu0 %v247
    %265 = vmatpush.bf16.msra.mxu0 %v246
    %266 = vmatpush.bf16.msra.mxu0 %v245
    %267 = vmatpush.bf16.msra.mxu0 %v244
    %268 = vmatmul.bf16.gmra.mxu0 %v192
    %v269 = vpop.f32.mrf.mxu0
    %v270 = vadd.f32 %v210, %v269
    %v271 = vpop.f32.mrf.mxu0
    %272 = vdwg.mxu0
    %v273 = vxor.u32 %v270, 2147483648
    %v274 = vmul.f32 %v273, 1.442695
    %v275 = vpow.pop %v274
    %v276 = vadd.f32 %v275, 1.0
    %v277 = vrcp.pop %v276
    %v278 = vmul.f32 %v276, %v277
    %v279 = vsub.f32 1.0, %v278
    %v280 = vmul.f32 %v277, %v279
    %v281 = vadd.f32 %v277, %v280
    %vm282 = vweird.f32 %v276
    %vm283 = vweird.f32 %v277
    %vm284 = vmor %vm282, %vm283
    %v285 = vsel %vm284, %v277, %v281
    %v286 = vand.u32 2147483647, %v276
    %vm287 = vcmp.eq.f32.partialorder %v286, 8.507059e+37
    %v288 = vand.u32 %v276, 2147483648
    %v289 = vor.u32 1.1754944e-38, %v288
    %v290 = vsel %vm287, %v289, %v285
    %v291 = vmul.f32 1.0, %v290
    %vm292 = vcmask 7168
    %293 = vst.msk [vmem:[%s5] sm:$0xff] %vm292, %v291
    // Predicated region
    $region34: #{tpu_custom_call.1} parent=1 // pred_check
      _
    $region35: #{tpu_custom_call.1} parent=1 // pred_check_branch
      %295 = sbr.rel (0) target = $region37
    $region36: #{tpu_custom_call.1} parent=1 // pred_region
      _
    $region37: #{tpu_custom_call.1} parent=1 // pred_fallthru
      _
    // Predicated region
    $region38: #{tpu_custom_call.1} parent=1 // pred_check
      _
    $region39: #{tpu_custom_call.1} parent=1 // pred_check_branch
      %297 = sbr.rel (0) target = $region41
    $region40: #{tpu_custom_call.1} parent=1 // pred_region
      _
    $region41: #{tpu_custom_call.1} parent=1 // pred_fallthru
      _
    %298 = vsyncpa [#allocation3], 1
    %299 = vsyncpa [#allocation5], 1

</llo_original>
